<compile_context>
chip_gen: v6e
topology: v6e:2x2x1
jax: 0.10.0
libtpu: 0.0.40
codegen_flags: <defaults>
</compile_context>

<pallas_src>
import math

import jax
import jax.numpy as jnp
from jax.experimental import pallas as pl
from jax.experimental.pallas import tpu as pltpu


def _dma_copy_kernel(x_hbm, o_hbm, sem):
    # Whole-tensor HBM->HBM DMA: no VMEM staging, no grid, no masked tails.
    cp = pltpu.make_async_copy(x_hbm, o_hbm, sem)
    cp.start()
    cp.wait()


def _resolve_size(total, size):
    """torch.Tensor.view-style shape resolution (a single -1 is allowed)."""
    size = list(size)
    n_neg = size.count(-1)
    if n_neg > 1:
        raise ValueError("only one dimension can be inferred (-1)")
    if n_neg == 1:
        idx = size.index(-1)
        known = 1
        for i, s in enumerate(size):
            if i != idx:
                known *= s
        if known <= 0 or total % known != 0:
            raise ValueError(
                f"cannot view {total} elements as shape {tuple(size)}")
        size[idx] = total // known
    if math.prod(size) != total:
        raise ValueError(
            f"view size {tuple(size)} incompatible with {total} elements")
    return tuple(size)


def pallas_reshape(x, *size, materialize=False):
    """Reproduces torch.Tensor.view(*size) (row-major reshape) on TPU.

    materialize=False (default): metadata-only reshape, zero HBM traffic —
    this is the fastest possible implementation and matches .view semantics.
    materialize=True: force a physical copy via one HBM->HBM DMA kernel.
    """
    total = x.size
    out_shape = _resolve_size(total, size)

    if not materialize or total == 0:
        # Fast path: a contiguous row-major view is pure metadata.
        return jnp.reshape(x, out_shape)

    # Materialized copy path: zero compute, so the optimal schedule is a
    # single large DMA between the input and output HBM buffers.
    # NOTE: jnp.reshape here is metadata-only for default row-major layouts;
    # if XLA hands us a non-default layout it inserts its own copy (correct,
    # just extra traffic) — TODO(synk): accept strided layouts directly.
    x_view = jnp.reshape(x, out_shape)
    nbytes = total * jnp.dtype(x.dtype).itemsize

    return pl.pallas_call(
        _dma_copy_kernel,
        out_shape=jax.ShapeDtypeStruct(out_shape, x.dtype),
        in_specs=[pl.BlockSpec(memory_space=pl.ANY)],
        out_specs=pl.BlockSpec(memory_space=pl.ANY),
        scratch_shapes=[pltpu.SemaphoreType.DMA(())],
        cost_estimate=pl.CostEstimate(
            flops=0, transcendentals=0, bytes_accessed=2 * nbytes),
    )(x_view)


class Reshape:
    """Pallas analogue of the PyTorch `Reshape` nn.Module (x.view(*size))."""

    def __init__(self, *size, materialize=False):
        self.size = size
        self.materialize = materialize

    def __call__(self, x):
        return pallas_reshape(x, *self.size, materialize=self.materialize)


if __name__ == "__main__":
    k1, k2 = jax.random.split(jax.random.PRNGKey(0))

    # Primary test: small NCHW feature map, flatten spatial dims.
    # Default module path = metadata-only view (the recommended fast path).
    x = jax.random.normal(k1, (2, 4, 16, 16), dtype=jnp.float32)
    mod = Reshape(2, 4, -1)
    y = jax.block_until_ready(mod(x))
    ref = x.reshape(2, 4, -1)
    assert y.shape == ref.shape, (y.shape, ref.shape)
    assert y.dtype == ref.dtype
    assert bool(jnp.array_equal(y, ref))

    # Same reshape through the materializing Pallas HBM->HBM DMA kernel.
    y_k = jax.block_until_ready(pallas_reshape(x, 2, 4, -1, materialize=True))
    assert y_k.shape == ref.shape, (y_k.shape, ref.shape)
    assert y_k.dtype == ref.dtype
    assert bool(jnp.array_equal(y_k, ref))

    # Larger tensor (≈3 MiB) through the single-DMA kernel, with an odd
    # (non-128-multiple) output minor dimension to exercise generic shapes.
    x2 = jax.random.normal(k2, (3, 1000, 256), dtype=jnp.float32)
    y2 = jax.block_until_ready(pallas_reshape(x2, -1, 500, materialize=True))
    ref2 = x2.reshape(-1, 500)
    assert y2.shape == ref2.shape, (y2.shape, ref2.shape)
    assert bool(jnp.array_equal(y2, ref2))

    print("KERNEL_OK")
</pallas_src>

<mosaic_0001>
module attributes {stable_mosaic.version = 11 : i64} {
  func.func @_dma_copy_kernel(%arg0: memref<2x4x256xf32, #tpu.memory_space<any>>, %arg1: memref<2x4x256xf32, #tpu.memory_space<any>>, %arg2: memref<!tpu.dma_semaphore, #tpu.memory_space<semaphore_mem>>) attributes {dimension_semantics = [], scalar_prefetch = 0 : i64, scratch_operands = 1 : i64, tpu.core_type = #tpu.core_type<tc>} {
    tpu.enqueue_dma source(%arg0 : memref<2x4x256xf32, #tpu.memory_space<any>>) target(%arg1 : memref<2x4x256xf32, #tpu.memory_space<any>>) target_semaphore(%arg2 : memref<!tpu.dma_semaphore, #tpu.memory_space<semaphore_mem>>)
    tpu.wait_dma2 semaphore(%arg2 : memref<!tpu.dma_semaphore, #tpu.memory_space<semaphore_mem>>) src(%arg0 : memref<2x4x256xf32, #tpu.memory_space<any>>) dst(%arg1 : memref<2x4x256xf32, #tpu.memory_space<any>>)
    return
  }
}

</mosaic_0001>

<llo_original>
// kernel: tpu_custom_call.1
$region0: #{tpu_custom_call.1}
  #allocation0 [shape = 'u32[]', space=smem, size = 0x4, offset = 0x4, fixed_abs, tag = 'smem constant byte address 0x4 - core index']
  #allocation1 [shape = 'u32[144,128]{1,0:T(1,128)}', space=vmem, size = 0x12000, scoped, tag = 'internal scratch']
  #allocation2 [shape = 's32[1]{0}', space=sflag, size = 0x4, scoped, tag = 'scratch operand']
  #allocation3 [shape = 's32[]', space=sflag, size = 0x4, offset = 0, fixed_abs, tag = 'sflag constant byte address 0x0 - dummy sync flag']
  #allocation4 [shape = 'u32[0]{0}', space=smem, size = 0, offset = 0, fixed_abs, tag = 'smem constant byte address 0x0 - null']
  %s0 = inlined_call_operand.hbm [shape: f32[2,4,256], index: 0, kind: input, shape index: {}]
  %s1 = inlined_call_operand.hbm [shape: f32[2,4,256], index: 1, kind: output, shape index: {}]
  %s2 = sld [smem:[#allocation0]]
  $region2: #{tpu_custom_call.1} parent=0
    _
  %s4 = ssub.s32 1, %s2
  %s5 = scalar_select 0, %s4, %s2
  %s7 = sshll.u32 1, 14
  %s8 = sxor.u32 4294967295, %s7
  %12 = dma.general %s0, 256, %s1, [#allocation2], 131072, [#allocation4], 0, 0
  %s13 = smul.u32 4, 2
  %s14 = smul.u32 %s13, 1
  %s15 = smul.u32 %s14, 2
  %s16 = sshll.u32 %s15, 4
  %17 = dma.done [#allocation2], %s16
  %18 = vsyncmov [#allocation2]
  %s19 = vpop.sfrf %18
  %p20 = scmp.eq.s32.totalorder %s19, 0
  %p21 = pneg %p20
  %23 = shalt.err (%p21)

</llo_original>
